<compile_context>
chip_gen: v7x
topology: tpu7x:2x2x1
jax: 0.10.0
libtpu: 0.0.40
codegen_flags: <defaults>
</compile_context>

<pallas_src>
import functools

import numpy as np
import jax
import jax.numpy as jnp
from jax.experimental import pallas as pl
from jax.experimental.pallas import tpu as pltpu


_VMEM_LIMIT_BYTES = 32 * 1024 * 1024  # safe on v5e/v6e (128 MiB) and v7x (64 MiB physical)


def _round_up(x, m):
    return ((x + m - 1) // m) * m


def _pick_time_tile(t):
    """Tile along T: multiple of 128, ~32K samples, minimal zero padding."""
    target = 32768
    n_tiles = max(1, -(-t // target))
    tile = -(-t // n_tiles)
    return _round_up(tile, 128)


def _pick_frame_tile(n_frames, n_fft):
    """Tile along the frame axis: multiple of 16 (bf16 sublane packing), ~2 MiB of
    double-buffered target+estimate bf16 tiles per step, capped at 256 MXU rows."""
    budget_rows = max(16, (2 * 1024 * 1024) // (2 * 2 * 2 * n_fft))
    tile = max(16, min(256, (budget_rows // 16) * 16))
    if n_frames <= tile:
        return max(16, _round_up(n_frames, 16))
    return tile


# ----------------------------------------------------------------------------
# Kernel 1: scaling factor  alpha = sum(e*t) / (sum(e*e) + eps), tiled over T
# ----------------------------------------------------------------------------
def _alpha_kernel(tgt_ref, est_ref, alpha_ref, dot_acc, ss_acc, *, eps):
    i = pl.program_id(0)

    @pl.when(i == 0)
    def _():
        dot_acc[...] = jnp.zeros_like(dot_acc)
        ss_acc[...] = jnp.zeros_like(ss_acc)

    t = tgt_ref[...]                                   # (B, tile_t) f32
    e = est_ref[...]
    dot_acc[...] += jnp.sum(e * t, axis=-1, keepdims=True)
    ss_acc[...] += jnp.sum(e * e, axis=-1, keepdims=True)

    @pl.when(i == pl.num_programs(0) - 1)
    def _():
        alpha_ref[...] = dot_acc[...] / (ss_acc[...] + eps)


def compute_alpha(target_p, estimate_p, *, eps, tile_t):
    B, Tp = target_p.shape
    grid = (Tp // tile_t,)
    return pl.pallas_call(
        functools.partial(_alpha_kernel, eps=eps),
        out_shape=jax.ShapeDtypeStruct((B, 1), jnp.float32),
        grid=grid,
        in_specs=[pl.BlockSpec((B, tile_t), lambda i: (0, i)),
                  pl.BlockSpec((B, tile_t), lambda i: (0, i))],
        out_specs=pl.BlockSpec((B, 1), lambda i: (0, 0)),
        scratch_shapes=[pltpu.VMEM((B, 1), jnp.float32),
                        pltpu.VMEM((B, 1), jnp.float32)],
        compiler_params=pltpu.CompilerParams(
            dimension_semantics=("arbitrary",),
            vmem_limit_bytes=_VMEM_LIMIT_BYTES),
    )(target_p, estimate_p)


# ----------------------------------------------------------------------------
# Kernel 2: time-domain L1  sum/mean |e*alpha - t|, tiled over T
# ----------------------------------------------------------------------------
def _td_kernel(alpha_ref, tgt_ref, est_ref, td_ref, *, true_t, reduction):
    i = pl.program_id(0)

    @pl.when(i == 0)
    def _():
        td_ref[...] = jnp.zeros_like(td_ref)

    a = alpha_ref[...]                                 # (B, 1), resident (constant index)
    err = jnp.abs(est_ref[...] * a - tgt_ref[...])     # (B, tile_t)
    td_ref[...] += jnp.sum(err, axis=-1, keepdims=True)

    if reduction == "mean":
        @pl.when(i == pl.num_programs(0) - 1)
        def _():
            td_ref[...] = td_ref[...] * (1.0 / float(true_t))


def time_domain_loss(alpha, target_p, estimate_p, *, true_t, reduction, tile_t):
    B, Tp = target_p.shape
    grid = (Tp // tile_t,)
    return pl.pallas_call(
        functools.partial(_td_kernel, true_t=true_t, reduction=reduction),
        out_shape=jax.ShapeDtypeStruct((B, 1), jnp.float32),
        grid=grid,
        in_specs=[pl.BlockSpec((B, 1), lambda i: (0, 0)),
                  pl.BlockSpec((B, tile_t), lambda i: (0, i)),
                  pl.BlockSpec((B, tile_t), lambda i: (0, i))],
        out_specs=pl.BlockSpec((B, 1), lambda i: (0, 0)),
        compiler_params=pltpu.CompilerParams(
            dimension_semantics=("arbitrary",),
            vmem_limit_bytes=_VMEM_LIMIT_BYTES),
    )(alpha, target_p, estimate_p)


# ----------------------------------------------------------------------------
# Kernel 3: one STFT resolution -> per-batch spectral L1, tiled over frames
#   grid = (batch "parallel", frame-tile "arbitrary")
#   bf16 frames @ fused bf16 [cos | sin] basis (lane-padded)  ->  f32 magnitudes
#   estimate magnitude scaled by |alpha| AFTER the matmul (exact: |a*E| == |a|*|E|)
# ----------------------------------------------------------------------------
def _spec_kernel(alpha_ref, tf_ref, ef_ref, basis_ref, out_ref, *, n_freq_pad, scale):
    n = pl.program_id(1)

    @pl.when(n == 0)
    def _():
        out_ref[...] = jnp.zeros_like(out_ref)

    basis = basis_ref[...]                             # (W, 2*Fp) bf16, stays resident

    def magnitude(rows_bf16):                          # (tile_f, W) bf16
        res = jnp.dot(rows_bf16, basis, preferred_element_type=jnp.float32)
        re = res[:, :n_freq_pad]
        im = res[:, n_freq_pad:]
        return jnp.sqrt(re * re + im * im)             # (tile_f, Fp) f32

    t_mag = magnitude(tf_ref[...])
    e_mag = magnitude(ef_ref[...])
    a = jnp.abs(alpha_ref[...])                        # (1, 1); alpha may be negative
    d = jnp.abs(e_mag * a - t_mag)                     # padded freqs/frames are exactly 0
    part = jnp.sum(d, axis=-1, keepdims=True)          # (tile_f, 1)
    out_ref[...] += jnp.sum(part, axis=0, keepdims=True)   # (1, 1)

    if scale != 1.0:
        @pl.when(n == pl.num_programs(1) - 1)
        def _():
            out_ref[...] = out_ref[...] * scale


def spectral_loss(alpha, tgt_frames, est_frames, basis, *, n_freq_pad, scale, tile_f):
    B, NFp, W = tgt_frames.shape
    grid = (B, NFp // tile_f)
    return pl.pallas_call(
        functools.partial(_spec_kernel, n_freq_pad=n_freq_pad, scale=scale),
        out_shape=jax.ShapeDtypeStruct((B, 1), jnp.float32),
        grid=grid,
        in_specs=[pl.BlockSpec((1, 1), lambda b, n: (b, 0)),
                  pl.BlockSpec((None, tile_f, W), lambda b, n: (b, n, 0)),
                  pl.BlockSpec((None, tile_f, W), lambda b, n: (b, n, 0)),
                  pl.BlockSpec(basis.shape, lambda b, n: (0, 0))],      # resident
        out_specs=pl.BlockSpec((1, 1), lambda b, n: (b, 0)),
        compiler_params=pltpu.CompilerParams(
            dimension_semantics=("parallel", "arbitrary"),
            vmem_limit_bytes=_VMEM_LIMIT_BYTES),
    )(alpha, tgt_frames, est_frames, basis)


# ----------------------------------------------------------------------------
# JAX glue: reflect-pad + frame extraction and the fused, lane-padded DFT basis
# ----------------------------------------------------------------------------
def frame_signal(x, n_fft, hop, n_frames, n_frames_pad):
    """(B, T) -> (B, n_frames_pad, n_fft); pad frames read a zero region (exact zeros)."""
    B, T = x.shape
    pad = n_fft // 2
    xp = jnp.pad(x, ((0, 0), (pad, pad)), mode="reflect")
    starts = jnp.arange(n_frames_pad, dtype=jnp.int32) * hop
    if n_frames_pad > n_frames:
        zero_start = xp.shape[1]
        xp = jnp.pad(xp, ((0, 0), (0, n_fft)))        # appended zeros for pad frames
        starts = jnp.where(jnp.arange(n_frames_pad) < n_frames, starts, zero_start)
    idx = starts[:, None] + jnp.arange(n_fft, dtype=jnp.int32)[None, :]
    return xp[:, idx]                                  # (B, n_frames_pad, n_fft)


def dft_basis(n_fft, n_freq_pad):
    """Fused [cos | sin] real-DFT basis, zero-padded along F to a lane multiple, bf16."""
    n_freq = n_fft // 2 + 1
    n = np.arange(n_fft, dtype=np.float64)[:, None]
    k = np.arange(n_freq, dtype=np.float64)[None, :]
    ang = 2.0 * np.pi * n * k / n_fft
    cos = np.zeros((n_fft, n_freq_pad), dtype=np.float32)
    sin = np.zeros((n_fft, n_freq_pad), dtype=np.float32)
    cos[:, :n_freq] = np.cos(ang)
    sin[:, :n_freq] = np.sin(ang)
    basis = np.concatenate([cos, sin], axis=1)         # (W, 2*Fp)
    return jnp.asarray(basis, dtype=jnp.bfloat16)


def multi_res_l1_spec_loss(target, estimate, *, window_sz=(512,), hop_sz=None,
                           eps=1e-8, time_domain_weight=0.5,
                           normalize_variance=False, reduction="sum"):
    """forward(target (B,T), estimate (B,T)) -> loss (B,) — matches MultiResL1SpecLoss."""
    assert target.shape == estimate.shape, (target.shape, estimate.shape)
    assert reduction in ("sum", "mean")
    assert all(w % 2 == 0 for w in window_sz)
    target = target.astype(jnp.float32)
    estimate = estimate.astype(jnp.float32)
    B, T = target.shape
    if normalize_variance:
        # torch.std is unbiased (ddof=1)
        target = target / jnp.std(target, axis=1, keepdims=True, ddof=1)
        estimate = estimate / jnp.std(estimate, axis=1, keepdims=True, ddof=1)
    if hop_sz is None:
        hop_sz = tuple(w // 2 for w in window_sz)

    # --- time-domain part: zero-pad T so the time axis tiles evenly (zeros add 0) ---
    tile_t = _pick_time_tile(T)
    Tp = _round_up(T, tile_t)
    if Tp != T:
        tgt_p = jnp.pad(target, ((0, 0), (0, Tp - T)))
        est_p = jnp.pad(estimate, ((0, 0), (0, Tp - T)))
    else:
        tgt_p, est_p = target, estimate

    alpha = compute_alpha(tgt_p, est_p, eps=eps, tile_t=tile_t)
    td_loss = time_domain_loss(alpha, tgt_p, est_p, true_t=T,
                               reduction=reduction, tile_t=tile_t)

    if len(window_sz) == 0:
        return td_loss[:, 0]

    # --- spectral part ---
    spec_loss = jnp.zeros((B, 1), dtype=jnp.float32)
    for w, h in zip(window_sz, hop_sz):
        n_freq = w // 2 + 1
        n_freq_pad = _round_up(n_freq, 128)            # lane-dense matmul/VPU work
        n_frames = 1 + T // h                          # torch.stft(center=True) count
        tile_f = _pick_frame_tile(n_frames, w)
        n_frames_pad = _round_up(n_frames, tile_f)
        basis = dft_basis(w, n_freq_pad)
        tf = frame_signal(target, w, h, n_frames, n_frames_pad).astype(jnp.bfloat16)
        ef = frame_signal(estimate, w, h, n_frames, n_frames_pad).astype(jnp.bfloat16)
        # mean divides by the TRUE frame/freq counts, not the padded ones
        scale = 1.0 if reduction == "sum" else 1.0 / float(n_frames * n_freq)
        spec_loss = spec_loss + spectral_loss(alpha, tf, ef, basis,
                                              n_freq_pad=n_freq_pad, scale=scale,
                                              tile_f=tile_f)

    loss = (td_loss * time_domain_weight
            + (1.0 - time_domain_weight) * spec_loss / len(window_sz))
    return loss[:, 0]


# ----------------------------------------------------------------------------
# Pure-JAX f32 reference (same math, no Pallas) for a sanity check
# ----------------------------------------------------------------------------
def _reference_frames(x, n_fft, hop, n_frames):
    pad = n_fft // 2
    xp = jnp.pad(x, ((0, 0), (pad, pad)), mode="reflect")
    idx = jnp.arange(n_frames)[:, None] * hop + jnp.arange(n_fft)[None, :]
    return xp[:, idx]


def reference_loss(target, estimate, *, window_sz, hop_sz, eps, time_domain_weight, reduction):
    t = target.astype(jnp.float32)
    e = estimate.astype(jnp.float32)
    alpha = (jnp.sum(e * t, -1, keepdims=True)
             / (jnp.sum(e * e, -1, keepdims=True) + eps))
    err = jnp.abs(e * alpha - t)
    td = jnp.sum(err, -1) if reduction == "sum" else jnp.mean(err, -1)
    spec = jnp.zeros_like(td)
    hi = jax.lax.Precision.HIGHEST
    for w, h in zip(window_sz, hop_sz):
        n_freq = w // 2 + 1
        n = np.arange(w, dtype=np.float64)[:, None]
        k = np.arange(n_freq, dtype=np.float64)[None, :]
        ang = 2.0 * np.pi * n * k / w
        C = jnp.asarray(np.cos(ang), jnp.float32)
        S = jnp.asarray(np.sin(ang), jnp.float32)
        n_frames = 1 + t.shape[1] // h
        tf = _reference_frames(t, w, h, n_frames)
        ef = _reference_frames(e * alpha, w, h, n_frames)
        tmag = jnp.sqrt(jnp.einsum("bnw,wf->bnf", tf, C, precision=hi) ** 2
                        + jnp.einsum("bnw,wf->bnf", tf, S, precision=hi) ** 2)
        emag = jnp.sqrt(jnp.einsum("bnw,wf->bnf", ef, C, precision=hi) ** 2
                        + jnp.einsum("bnw,wf->bnf", ef, S, precision=hi) ** 2)
        d = jnp.abs(emag - tmag)
        spec = spec + (jnp.sum(d, axis=(1, 2)) if reduction == "sum"
                       else jnp.mean(d, axis=(1, 2)))
    return td * time_domain_weight + (1.0 - time_domain_weight) * spec / len(window_sz)


if __name__ == "__main__":
    key = jax.random.PRNGKey(0)
    k1, k2 = jax.random.split(key)
    B, T = 2, 1024
    window_sz = (128, 256)           # small multi-resolution config (all even)
    hop_sz = tuple(w // 2 for w in window_sz)

    target = jax.random.normal(k1, (B, T), dtype=jnp.float32)
    estimate = target + 0.3 * jax.random.normal(k2, (B, T), dtype=jnp.float32)

    for red in ("sum", "mean"):
        loss = multi_res_l1_spec_loss(target, estimate, window_sz=window_sz, hop_sz=hop_sz,
                                      eps=1e-8, time_domain_weight=0.5,
                                      normalize_variance=False, reduction=red)
        loss = jax.block_until_ready(loss)

        ref = reference_loss(target, estimate, window_sz=window_sz, hop_sz=hop_sz,
                             eps=1e-8, time_domain_weight=0.5, reduction=red)
        ref = jax.block_until_ready(ref)

        assert loss.shape == (B,)
        np.testing.assert_allclose(np.asarray(loss), np.asarray(ref), rtol=2e-2, atol=1e-2)
        assert bool(jnp.all(jnp.isfinite(loss)))

    print("KERNEL_OK")
</pallas_src>

<mosaic_0001>
module attributes {stable_mosaic.version = 11 : i64} {
  func.func @_alpha_kernel(%arg0: i32, %arg1: memref<2x1024xf32, #tpu.memory_space<vmem>>, %arg2: memref<2x1024xf32, #tpu.memory_space<vmem>>, %arg3: memref<2x1xf32, #tpu.memory_space<vmem>>, %arg4: memref<2x1xf32, #tpu.memory_space<vmem>>, %arg5: memref<2x1xf32, #tpu.memory_space<vmem>>) attributes {dimension_semantics = [#tpu.dimension_semantics<arbitrary>], iteration_bounds = array<i64: 1>, scalar_prefetch = 0 : i64, scratch_operands = 2 : i64, tpu.core_type = #tpu.core_type<tc>, window_params = [{transform_indices = @transform_0, window_bounds = array<i64: 2, 1024>}, {transform_indices = @transform_1, window_bounds = array<i64: 2, 1024>}, {pipeline_mode = #tpu.pipeline_mode<synchronous>, transform_indices = @transform_2, window_bounds = array<i64: 2, 1>}]} {
    %c0_i32 = arith.constant 0 : i32
    %0 = arith.cmpi eq, %arg0, %c0_i32 : i32
    %1 = arith.extui %0 : i1 to i32
    %c0_i32_0 = arith.constant 0 : i32
    %2 = arith.cmpi ne, %1, %c0_i32_0 : i32
    scf.if %2 {
      %cst_15 = arith.constant 0.000000e+00 : f32
      %20 = vector.broadcast %cst_15 : f32 to vector<2x1xf32>
      %c0_16 = arith.constant 0 : index
      %c0_17 = arith.constant 0 : index
      %21 = vector.load %arg4[%c0_16, %c0_17] : memref<2x1xf32, #tpu.memory_space<vmem>>, vector<2x1xf32>
      tpu.vector_store %arg4[%c0_16, %c0_17], %20 {strides = array<i32>} : memref<2x1xf32, #tpu.memory_space<vmem>>, vector<2x1xf32>,
      %cst_18 = arith.constant 0.000000e+00 : f32
      %22 = vector.broadcast %cst_18 : f32 to vector<2x1xf32>
      %c0_19 = arith.constant 0 : index
      %c0_20 = arith.constant 0 : index
      %23 = vector.load %arg5[%c0_19, %c0_20] : memref<2x1xf32, #tpu.memory_space<vmem>>, vector<2x1xf32>
      tpu.vector_store %arg5[%c0_19, %c0_20], %22 {strides = array<i32>} : memref<2x1xf32, #tpu.memory_space<vmem>>, vector<2x1xf32>,
    } else {
    }
    %c0 = arith.constant 0 : index
    %c0_1 = arith.constant 0 : index
    %3 = vector.load %arg1[%c0, %c0_1] : memref<2x1024xf32, #tpu.memory_space<vmem>>, vector<2x1024xf32>
    %c0_2 = arith.constant 0 : index
    %c0_3 = arith.constant 0 : index
    %4 = vector.load %arg2[%c0_2, %c0_3] : memref<2x1024xf32, #tpu.memory_space<vmem>>, vector<2x1024xf32>
    %c0_4 = arith.constant 0 : index
    %c0_5 = arith.constant 0 : index
    %5 = vector.load %arg4[%c0_4, %c0_5] : memref<2x1xf32, #tpu.memory_space<vmem>>, vector<2x1xf32>
    %6 = arith.mulf %4, %3 : vector<2x1024xf32>
    %cst = arith.constant dense<0.000000e+00> : vector<2xf32>
    %7 = vector.multi_reduction <add>, %6, %cst [1] : vector<2x1024xf32> to vector<2xf32>
    %8 = vector.shape_cast %7 : vector<2xf32> to vector<2x1xf32>
    %9 = arith.addf %5, %8 : vector<2x1xf32>
    %c0_6 = arith.constant 0 : index
    %c0_7 = arith.constant 0 : index
    %10 = vector.load %arg4[%c0_6, %c0_7] : memref<2x1xf32, #tpu.memory_space<vmem>>, vector<2x1xf32>
    tpu.vector_store %arg4[%c0_6, %c0_7], %9 {strides = array<i32>} : memref<2x1xf32, #tpu.memory_space<vmem>>, vector<2x1xf32>,
    %c0_8 = arith.constant 0 : index
    %c0_9 = arith.constant 0 : index
    %11 = vector.load %arg5[%c0_8, %c0_9] : memref<2x1xf32, #tpu.memory_space<vmem>>, vector<2x1xf32>
    %12 = arith.mulf %4, %4 : vector<2x1024xf32>
    %cst_10 = arith.constant dense<0.000000e+00> : vector<2xf32>
    %13 = vector.multi_reduction <add>, %12, %cst_10 [1] : vector<2x1024xf32> to vector<2xf32>
    %14 = vector.shape_cast %13 : vector<2xf32> to vector<2x1xf32>
    %15 = arith.addf %11, %14 : vector<2x1xf32>
    %c0_11 = arith.constant 0 : index
    %c0_12 = arith.constant 0 : index
    %16 = vector.load %arg5[%c0_11, %c0_12] : memref<2x1xf32, #tpu.memory_space<vmem>>, vector<2x1xf32>
    tpu.vector_store %arg5[%c0_11, %c0_12], %15 {strides = array<i32>} : memref<2x1xf32, #tpu.memory_space<vmem>>, vector<2x1xf32>,
    %c0_i32_13 = arith.constant 0 : i32
    %17 = arith.cmpi eq, %arg0, %c0_i32_13 : i32
    %18 = arith.extui %17 : i1 to i32
    %c0_i32_14 = arith.constant 0 : i32
    %19 = arith.cmpi ne, %18, %c0_i32_14 : i32
    scf.if %19 {
      %c0_15 = arith.constant 0 : index
      %c0_16 = arith.constant 0 : index
      %20 = vector.load %arg4[%c0_15, %c0_16] : memref<2x1xf32, #tpu.memory_space<vmem>>, vector<2x1xf32>
      %c0_17 = arith.constant 0 : index
      %c0_18 = arith.constant 0 : index
      %21 = vector.load %arg5[%c0_17, %c0_18] : memref<2x1xf32, #tpu.memory_space<vmem>>, vector<2x1xf32>
      %cst_19 = arith.constant 9.99999993E-9 : f32
      %22 = vector.broadcast %cst_19 : f32 to vector<2x1xf32>
      %23 = arith.addf %21, %22 : vector<2x1xf32>
      %24 = arith.divf %20, %23 : vector<2x1xf32>
      %c0_20 = arith.constant 0 : index
      %c0_21 = arith.constant 0 : index
      %25 = vector.load %arg3[%c0_20, %c0_21] : memref<2x1xf32, #tpu.memory_space<vmem>>, vector<2x1xf32>
      tpu.vector_store %arg3[%c0_20, %c0_21], %24 {strides = array<i32>} : memref<2x1xf32, #tpu.memory_space<vmem>>, vector<2x1xf32>,
    } else {
    }
    return
  }
  func.func @transform_0(%arg0: i32) -> (i32, i32) {
    %c0_i32 = arith.constant 0 : i32
    %c0_i32_0 = arith.constant 0 : i32
    return %c0_i32, %arg0 : i32, i32
  }
  func.func @transform_1(%arg0: i32) -> (i32, i32) {
    %c0_i32 = arith.constant 0 : i32
    %c0_i32_0 = arith.constant 0 : i32
    return %c0_i32, %arg0 : i32, i32
  }
  func.func @transform_2(%arg0: i32) -> (i32, i32) {
    %c0_i32 = arith.constant 0 : i32
    %c0_i32_0 = arith.constant 0 : i32
    %c0_i32_1 = arith.constant 0 : i32
    return %c0_i32, %c0_i32_0 : i32, i32
  }
}

</mosaic_0001>

<llo_original>
// kernel: tpu_custom_call.1
$region0: #{tpu_custom_call.1}
  #allocation0 [shape = 'u32[]', space=smem, size = 0x4, offset = 0x4, fixed_abs, tag = 'smem constant byte address 0x4 - core index']
  #allocation1 [shape = 'u32[144,128]{1,0:T(1,128)}', space=vmem, size = 0x12000, scoped, tag = 'internal scratch']
  #allocation2 [shape = 'f32[2,1]{1,0:T(2,128)}', space=vmem, size = 0x400, scoped, tag = 'scratch operand']
  #allocation3 [shape = 'f32[2,1]{1,0:T(2,128)}', space=vmem, size = 0x400, scoped, tag = 'scratch operand']
  %s0 = inlined_call_operand.hbm [shape: f32[2,1024], index: 0, kind: input, shape index: {}]
  %s1 = inlined_call_operand.hbm [shape: f32[2,1024], index: 1, kind: input, shape index: {}]
  %s2 = inlined_call_operand.vmem [shape: f32[2,1], index: 2, kind: output, shape index: {}]
  %s3 = sld [smem:[#allocation0]]
  $region34: #{tpu_custom_call.1} parent=0
    _
  %s5 = ssub.s32 1, %s3
  %s6 = scalar_select 0, %s5, %s3
  $region1: #{tpu_custom_call.1} parent=0
    #allocation4 [shape = 'u8[8192]{0}', space=vmem, size = 0x2000, scoped, tag = 'input window, operand 0, single buffered']
    #allocation5 [shape = 's32[1]{0}', space=sflag, size = 0x4, scoped, tag = 'scoped memory for tpu_custom_call.1']
    #allocation6 [shape = 'u8[8192]{0}', space=vmem, size = 0x2000, scoped, tag = 'input window, operand 1, single buffered']
    #allocation7 [shape = 's32[1]{0}', space=sflag, size = 0x4, scoped, tag = 'scoped memory for tpu_custom_call.1']
    %7 = vsyncpa [#allocation5], 0
    %8 = vsyncpa [#allocation7], 0
    // Predicated region
    $region2: #{tpu_custom_call.1} parent=1 // pred_check
      _
    $region3: #{tpu_custom_call.1} parent=1 // pred_check_branch
      %10 = sbr.rel (0) target = $region5
    $region4: #{tpu_custom_call.1} parent=1 // pred_region
      %s12 = ssub.s32 256, 256
      %13 = vsyncadd [#allocation5], %s12
      %s15 = sshll.u32 [#allocation4], 4
      %s16 = int_to_ptr.vmem [resolvable:$true] %s15
      %18 = dma.hbm_to_vmem [thread:$0]  %s0, 256, %s16, [#allocation5]
    $region5: #{tpu_custom_call.1} parent=1 // pred_fallthru
      _
    // Predicated region
    $region6: #{tpu_custom_call.1} parent=1 // pred_check
      _
    $region7: #{tpu_custom_call.1} parent=1 // pred_check_branch
      %20 = sbr.rel (0) target = $region9
    $region8: #{tpu_custom_call.1} parent=1 // pred_region
      %s22 = ssub.s32 256, 256
      %23 = vsyncadd [#allocation7], %s22
      %s25 = sshll.u32 [#allocation6], 4
      %s26 = int_to_ptr.vmem [resolvable:$true] %s25
      %28 = dma.hbm_to_vmem [thread:$0]  %s1, 256, %s26, [#allocation7]
    $region9: #{tpu_custom_call.1} parent=1 // pred_fallthru
      _
    // Predicated region
    $region10: #{tpu_custom_call.1} parent=1 // pred_check
      _
    $region11: #{tpu_custom_call.1} parent=1 // pred_check_branch
      %30 = sbr.rel (0) target = $region13
    $region12: #{tpu_custom_call.1} parent=1 // pred_region
      %31 = dma.done [#allocation5], 256
    $region13: #{tpu_custom_call.1} parent=1 // pred_fallthru
      _
    // Predicated region
    $region14: #{tpu_custom_call.1} parent=1 // pred_check
      _
    $region15: #{tpu_custom_call.1} parent=1 // pred_check_branch
      %33 = sbr.rel (0) target = $region17
    $region16: #{tpu_custom_call.1} parent=1 // pred_region
      %34 = dma.done [#allocation7], 256
    $region17: #{tpu_custom_call.1} parent=1 // pred_fallthru
      _
    %p35 = scmp.eq.s32.totalorder 0, 0
    // Predicated region
    $region18: #{tpu_custom_call.1} parent=1 // pred_check
      %p36 = pneg %p35
    $region19: #{tpu_custom_call.1} parent=1 // pred_check_branch
      %38 = sbr.rel (%p36) target = $region21
    $region20: #{tpu_custom_call.1} parent=1 // pred_region
      %vm39 = vcmask 1024
      %40 = vst.msk [vmem:[#allocation2] sm:$0x3] %vm39, 0.0
      %41 = vst.msk [vmem:[#allocation3] sm:$0x3] %vm39, 0.0
    $region21: #{tpu_custom_call.1} parent=1 // pred_fallthru
      _
    %v42 = vld [vmem:[#allocation4] sm:$0xff]
    %v43 = vld [vmem:[#allocation4 + $0x8] sm:$0xff]
    %v44 = vld [vmem:[#allocation6] sm:$0xff]
    %v45 = vld [vmem:[#allocation6 + $0x8] sm:$0xff]
    %v46 = vld [vmem:[#allocation2] sm:$0x3]
    %v47 = vmul.f32 %v44, %v42
    %v48 = vmul.f32 %v45, %v43
    %v51 = vcombine.high %v47, %v47
    %v53 = vunpack.c.l.s4 1983009808
    %v54 = vunpack.c.0.s8 %v53
    %v55 = vlaneseq
    %v56 = vshrl.u32 %v55, 7
    %v57 = vsub.s32 %v54, %v56
    %v58 = vrot.slane %v47, %v57
    %v60 = vunpack.c.l.s4 1983009808
    %v61 = vunpack.c.0.s8 %v60
    %v62 = vlaneseq
    %v63 = vshrl.u32 %v62, 7
    %v64 = vsub.s32 %v61, %v63
    %v65 = vrot.slane %v51, %v64
    %v66 = vcombine.high %v58, %v58
    %v67 = vcombine.high %v65, %v65
    %v68 = vcombine.high %v48, %v48
    %v70 = vunpack.c.l.s4 1983009808
    %v71 = vunpack.c.0.s8 %v70
    %v72 = vlaneseq
    %v73 = vshrl.u32 %v72, 7
    %v74 = vsub.s32 %v71, %v73
    %v75 = vrot.slane %v48, %v74
    %v77 = vunpack.c.l.s4 1983009808
    %v78 = vunpack.c.0.s8 %v77
    %v79 = vlaneseq
    %v80 = vshrl.u32 %v79, 7
    %v81 = vsub.s32 %v78, %v80
    %v82 = vrot.slane %v68, %v81
    %v83 = vcombine.high %v75, %v75
    %v84 = vcombine.high %v82, %v82
    %vm93 = vcmask 1041408
    %v94 = vsel %vm93, %v58, 0.0
    %v95 = vsel %vm93, %v66, 0.0
    %v96 = vadd.f32 %v94, %v95
    %v97 = vsel %vm93, %v65, 0.0
    %v98 = vadd.f32 %v96, %v97
    %v99 = vsel %vm93, %v67, 0.0
    %v100 = vadd.f32 %v98, %v99
    %v101 = vsel %vm93, %v75, 0.0
    %v102 = vadd.f32 %v100, %v101
    %v103 = vsel %vm93, %v83, 0.0
    %v104 = vadd.f32 %v102, %v103
    %v105 = vsel %vm93, %v82, 0.0
    %v106 = vadd.f32 %v104, %v105
    %v107 = vsel %vm93, %v84, 0.0
    %v108 = vadd.f32 %v106, %v107
    %109 = vadd.xlane.f32.xlu0 %v108
    %v110 = vpop.xlane.xlu0 %109
    %v111 = vadd.f32 %v46, %v110
    %vm112 = vcmask 1024
    %113 = vst.msk [vmem:[#allocation2] sm:$0x3] %vm112, %v111
    %v114 = vld [vmem:[#allocation3] sm:$0x3]
    %v115 = vmul.f32 %v44, %v44
    %v116 = vmul.f32 %v45, %v45
    %v119 = vcombine.high %v115, %v115
    %v121 = vunpack.c.l.s4 1983009808
    %v122 = vunpack.c.0.s8 %v121
    %v123 = vlaneseq
    %v124 = vshrl.u32 %v123, 7
    %v125 = vsub.s32 %v122, %v124
    %v126 = vrot.slane %v115, %v125
    %v128 = vunpack.c.l.s4 1983009808
    %v129 = vunpack.c.0.s8 %v128
    %v130 = vlaneseq
    %v131 = vshrl.u32 %v130, 7
    %v132 = vsub.s32 %v129, %v131
    %v133 = vrot.slane %v119, %v132
    %v134 = vcombine.high %v126, %v126
    %v135 = vcombine.high %v133, %v133
    %v136 = vcombine.high %v116, %v116
    %v138 = vunpack.c.l.s4 1983009808
    %v139 = vunpack.c.0.s8 %v138
    %v140 = vlaneseq
    %v141 = vshrl.u32 %v140, 7
    %v142 = vsub.s32 %v139, %v141
    %v143 = vrot.slane %v116, %v142
    %v145 = vunpack.c.l.s4 1983009808
    %v146 = vunpack.c.0.s8 %v145
    %v147 = vlaneseq
    %v148 = vshrl.u32 %v147, 7
    %v149 = vsub.s32 %v146, %v148
    %v150 = vrot.slane %v136, %v149
    %v151 = vcombine.high %v143, %v143
    %v152 = vcombine.high %v150, %v150
    %v161 = vsel %vm93, %v126, 0.0
    %v162 = vsel %vm93, %v134, 0.0
    %v163 = vadd.f32 %v161, %v162
    %v164 = vsel %vm93, %v133, 0.0
    %v165 = vadd.f32 %v163, %v164
    %v166 = vsel %vm93, %v135, 0.0
    %v167 = vadd.f32 %v165, %v166
    %v168 = vsel %vm93, %v143, 0.0
    %v169 = vadd.f32 %v167, %v168
    %v170 = vsel %vm93, %v151, 0.0
    %v171 = vadd.f32 %v169, %v170
    %v172 = vsel %vm93, %v150, 0.0
    %v173 = vadd.f32 %v171, %v172
    %v174 = vsel %vm93, %v152, 0.0
    %v175 = vadd.f32 %v173, %v174
    %176 = vadd.xlane.f32.xlu0 %v175
    %v177 = vpop.xlane.xlu0 %176
    %v178 = vadd.f32 %v114, %v177
    %179 = vst.msk [vmem:[#allocation3] sm:$0x3] %vm112, %v178
    // Predicated region
    $region22: #{tpu_custom_call.1} parent=1 // pred_check
      %p180 = pneg %p35
    $region23: #{tpu_custom_call.1} parent=1 // pred_check_branch
      %182 = sbr.rel (%p180) target = $region25
    $region24: #{tpu_custom_call.1} parent=1 // pred_region
      %v183 = vld [vmem:[#allocation2] sm:$0x3]
      %v184 = vld [vmem:[#allocation3] sm:$0x3]
      %v185 = vadd.f32 %v184, 1e-08
      %v186 = vrcp.pop %v185
      %v187 = vmul.f32 %v183, %v186
      %188 = vst.msk [vmem:[%s2] sm:$0x3] %vm112, %v187
    $region25: #{tpu_custom_call.1} parent=1 // pred_fallthru
      _
    // Predicated region
    $region26: #{tpu_custom_call.1} parent=1 // pred_check
      _
    $region27: #{tpu_custom_call.1} parent=1 // pred_check_branch
      %190 = sbr.rel (0) target = $region29
    $region28: #{tpu_custom_call.1} parent=1 // pred_region
      _
    $region29: #{tpu_custom_call.1} parent=1 // pred_fallthru
      _
    // Predicated region
    $region30: #{tpu_custom_call.1} parent=1 // pred_check
      _
    $region31: #{tpu_custom_call.1} parent=1 // pred_check_branch
      %192 = sbr.rel (0) target = $region33
    $region32: #{tpu_custom_call.1} parent=1 // pred_region
      _
    $region33: #{tpu_custom_call.1} parent=1 // pred_fallthru
      _
    %193 = vsyncpa [#allocation5], 1
    %194 = vsyncpa [#allocation7], 1

</llo_original>
